<compile_context>
chip_gen: v6e
topology: v6e:2x2x1
jax: 0.10.0
libtpu: 0.0.40
codegen_flags: <defaults>
</compile_context>

<pallas_src>
import jax
import jax.numpy as jnp
from jax.experimental import pallas as pl
from jax.experimental.pallas import tpu as pltpu


def _make_kernel(n_rest):
    """Kernel factory for 1 (split xyz/feature) + n_rest further MLP layers."""

    def kernel(*args):
        xyz_ref, feat_ref, w1x_ref, w1f_ref, sh1_ref = args[:5]
        layer_refs = args[5:5 + 2 * n_rest]
        o_ref = args[5 + 2 * n_rest]
        acc_ref = args[6 + 2 * n_rest]

        k = pl.program_id(2)

        @pl.when(k == 0)
        def _():
            # ReLU output >= 0, so a zero init is exact for the running max.
            acc_ref[...] = jnp.zeros_like(acc_ref)

        xyz = xyz_ref[0]        # (3, TN)       f32, points on lanes
        feat = feat_ref[0]      # (C_feat, TN)  bf16

        # ---- layer 1 -------------------------------------------------------
        # feature part: bf16 MXU matmul, f32 accumulation
        h = jnp.dot(w1f_ref[...], feat, preferred_element_type=jnp.float32)
        # xyz part (K = 3): three VPU broadcast FMAs instead of a second MXU
        # pass (a K<=256 contraction costs a full result-tile pass regardless).
        w1x = w1x_ref[...]      # (C1, 3) f32
        h = h + (w1x[:, 0:1] * xyz[0:1, :]
                 + w1x[:, 1:2] * xyz[1:2, :]
                 + w1x[:, 2:3] * xyz[2:3, :])
        h = jnp.maximum(h + sh1_ref[...], 0.0)          # (C1, TN) f32

        # ---- remaining 1x1 conv (+ folded BN shift) + ReLU layers ----------
        for l in range(n_rest):
            w_ref = layer_refs[2 * l]
            sh_ref = layer_refs[2 * l + 1]
            h = jnp.dot(w_ref[...], h.astype(jnp.bfloat16),
                        preferred_element_type=jnp.float32)
            h = jnp.maximum(h + sh_ref[...], 0.0)       # (C_l, TN) f32

        # ---- running max, lane-dense (C_last, 128) scratch slab ------------
        m = acc_ref[...]
        for j in range(h.shape[1] // 128):              # TN is a multiple of 128
            m = jnp.maximum(m, h[:, j * 128:(j + 1) * 128])
        acc_ref[...] = m

        @pl.when(k == pl.num_programs(2) - 1)
        def _():
            # single cross-lane reduce + single masked store per (batch, split)
            o_ref[0, 0] = jnp.max(acc_ref[...], axis=1, keepdims=True)

    return kernel


def _vmem_limit_bytes():
    """Per-generation VMEM budget (<= 48 MiB so v7x's 64 MiB/TC is safe)."""
    cap = 128 * 1024 * 1024
    try:
        cap = int(pltpu.get_tpu_info().vmem_capacity_bytes)
    except Exception:
        pass
    return max(16 * 1024 * 1024, min(48 * 1024 * 1024, (cap * 3) // 4))


def _tile_plan(n, c_feat, widths, budget_bytes):
    """Channel- and budget-aware point tile size + padded point count."""
    p8 = lambda c: max(8, -(-c // 8) * 8)

    def tile_bytes(t):
        # double-buffered streamed inputs: xyz f32 + features bf16
        inp = 2 * (p8(3) * 4 + p8(c_feat) * 2) * t
        # per-layer intermediates: f32 activation + bf16 staging copy
        inter = sum(p8(c) * 6 for c in widths) * t
        return inp + inter

    tile = 128
    for t in (2048, 1024, 512, 256, 128):
        if tile_bytes(t) <= budget_bytes:
            tile = t
            break
    if n <= tile:
        tile = -(-n // 128) * 128       # single grid step, lane-aligned
    n_pad = -(-n // tile) * tile
    return tile, n_pad


def pointnet_sa_module(xyz, features, params, *, tile_n=None):
    """GroupAll PointnetSAModule forward.

    xyz:      (B, N, 3)  float32
    features: (B, C, N)  float32
    params:   [(w_l, sc_l, sh_l), ...] with w_l (C_in_l, C_out_l),
              sc_l / sh_l (1, C_out_l) -- BatchNorm already folded into
              per-channel scale/shift.  w_1 has C_in_1 = 3 + C (use_xyz=True).

    Returns (new_xyz=None, new_features (B, mlp[-1], 1)) like the torch module.
    """
    B, N, three = xyz.shape
    assert three == 3
    _, c_feat, n_f = features.shape
    assert n_f == N
    assert c_feat >= 1

    widths = [w.shape[1] for (w, _, _) in params]
    c1, c_last = widths[0], widths[-1]
    assert params[0][0].shape[0] == 3 + c_feat

    vmem_limit = _vmem_limit_bytes()
    if tile_n is None:
        tile_n, n_pad = _tile_plan(N, c_feat, widths, (vmem_limit * 5) // 8)
    else:
        tile_n = min(-(-tile_n // 128) * 128, -(-N // 128) * 128)
        n_pad = -(-N // tile_n) * tile_n

    # v7x has 2 TensorCores: with B == 1 split the point axis across them.
    n_split = 1
    if B == 1 and n_pad // tile_n >= 2:
        n_split = 2
        n_pad = -(-n_pad // (2 * tile_n)) * (2 * tile_n)
    steps = n_pad // tile_n
    sps = steps // n_split                       # reduction steps per split

    # channels-first xyz (cheap: only 3 channels) stays f32; features as bf16.
    xyz_cn = jnp.transpose(xyz, (0, 2, 1)).astype(jnp.float32)   # (B, 3, N)
    feats = features.astype(jnp.bfloat16)                        # (B, C, N)
    if n_pad > N:
        # repeat the last point: idempotent under the global max (ReLU >= 0
        # alone would NOT be safe -- a zero point can still exceed the max).
        xyz_cn = jnp.pad(xyz_cn, ((0, 0), (0, 0), (0, n_pad - N)), mode="edge")
        feats = jnp.pad(feats, ((0, 0), (0, 0), (0, n_pad - N)), mode="edge")

    # fold BN scale into the conv weights; (C_out, C_in) layout so matmul
    # outputs have channels on sublanes and points on lanes.
    (w1, sc1, sh1) = params[0]
    w1s = jnp.transpose(w1 * sc1)                    # (C1, 3 + C_feat) f32
    w1x = w1s[:, :3].astype(jnp.float32)             # xyz part   -> VPU FMAs
    w1f = w1s[:, 3:].astype(jnp.bfloat16)            # feat part  -> bf16 MXU
    sh1c = jnp.transpose(sh1).astype(jnp.float32)    # (C1, 1)

    rest = []
    for (w, sc, sh) in params[1:]:
        rest.append((jnp.transpose(w * sc).astype(jnp.bfloat16),
                     jnp.transpose(sh).astype(jnp.float32)))

    pt_spec = lambda c: pl.BlockSpec((1, c, tile_n),
                                     lambda b, s, k: (b, 0, s * sps + k))
    const = lambda shape: pl.BlockSpec(shape, lambda b, s, k: (0, 0))

    in_specs = [pt_spec(3), pt_spec(c_feat),
                const((c1, 3)), const((c1, c_feat)), const((c1, 1))]
    const_args = [w1x, w1f, sh1c]
    for w, sh in rest:
        in_specs += [const(w.shape), const(sh.shape)]
        const_args += [w, sh]

    out = pl.pallas_call(
        _make_kernel(len(params) - 1),
        out_shape=jax.ShapeDtypeStruct((B, n_split, c_last, 1), jnp.float32),
        grid=(B, n_split, sps),
        in_specs=in_specs,
        out_specs=pl.BlockSpec((1, 1, c_last, 1), lambda b, s, k: (b, s, 0, 0)),
        scratch_shapes=[pltpu.VMEM((c_last, 128), jnp.float32)],
        compiler_params=pltpu.CompilerParams(
            dimension_semantics=("parallel", "parallel", "arbitrary"),
            vmem_limit_bytes=vmem_limit,
        ),
    )(xyz_cn, feats, *const_args)

    new_features = jnp.max(out, axis=1)    # combine point-split halves
    new_xyz = None
    return new_xyz, new_features           # (None, (B, mlp[-1], 1))


# --------------------------------------------------------------------------- #
# test harness
# --------------------------------------------------------------------------- #
def _fold_bn(gamma, beta, mean, var, eps=1e-5):
    scale = gamma / jnp.sqrt(var + eps)
    shift = beta - mean * scale
    return scale[None, :], shift[None, :]


def _make_params(key, mlp_spec):
    """Deterministic init of Conv2d(1x1, bias=False) + BatchNorm2d per layer."""
    params = []
    for i in range(1, len(mlp_spec)):
        c_in, c_out = mlp_spec[i - 1], mlp_spec[i]
        key, kw, kg, kb, km, kv = jax.random.split(key, 6)
        # torch Conv2d weight is (C_out, C_in, 1, 1); we store (C_in, C_out).
        w = jax.random.normal(kw, (c_in, c_out), jnp.float32) * 0.2
        gamma = 1.0 + 0.1 * jax.random.normal(kg, (c_out,), jnp.float32)
        beta = 0.1 * jax.random.normal(kb, (c_out,), jnp.float32)
        mean = 0.1 * jax.random.normal(km, (c_out,), jnp.float32)
        var = 1.0 + 0.1 * jnp.abs(jax.random.normal(kv, (c_out,), jnp.float32))
        sc, sh = _fold_bn(gamma, beta, mean, var)
        params.append((w, sc, sh))
    return params


def _reference(xyz, features, params):
    """Pure-JAX reference mirroring the kernel's bf16 data path."""
    bf = lambda a: a.astype(jnp.bfloat16).astype(jnp.float32)
    hi = jax.lax.Precision.HIGHEST
    (w1, sc1, sh1) = params[0]
    w1s = w1 * sc1                                         # (3 + C, C1)
    feat_t = jnp.transpose(features, (0, 2, 1))            # (B, N, C)
    h = (jnp.einsum("bnk,ko->bno", xyz, w1s[:3], precision=hi)
         + jnp.einsum("bnc,co->bno", bf(feat_t), bf(w1s[3:]), precision=hi)
         + sh1)
    h = jnp.maximum(h, 0.0)
    for w, sc, sh in params[1:]:
        h = jnp.maximum(
            jnp.einsum("bni,io->bno", bf(h), bf(w * sc), precision=hi) + sh, 0.0)
    pooled = jnp.max(h, axis=1)                            # (B, C_last)
    return pooled[:, :, None]                              # (B, C_last, 1)


if __name__ == "__main__":
    key = jax.random.PRNGKey(0)
    B, N, C_feat = 2, 128, 4
    mlp = [C_feat, 16, 32, 64]
    mlp_with_xyz = [mlp[0] + 3] + mlp[1:]     # use_xyz=True

    kx, kf, kp = jax.random.split(key, 3)
    xyz = jax.random.normal(kx, (B, N, 3), jnp.float32)
    features = jax.random.normal(kf, (B, C_feat, N), jnp.float32)
    params = _make_params(kp, mlp_with_xyz)

    new_xyz, new_features = pointnet_sa_module(xyz, features, params)
    new_features = jax.block_until_ready(new_features)

    ref = _reference(xyz, features, params)
    assert new_xyz is None
    assert new_features.shape == (B, mlp_with_xyz[-1], 1)
    err = float(jnp.max(jnp.abs(new_features - ref)))
    assert jnp.allclose(new_features, ref, atol=2e-2, rtol=2e-2), err

    print("KERNEL_OK")
</pallas_src>

<mosaic_0001>
module attributes {stable_mosaic.version = 11 : i64} {
  func.func @kernel(%arg0: i32, %arg1: i32, %arg2: i32, %arg3: memref<1x3x128xf32, #tpu.memory_space<vmem>>, %arg4: memref<1x4x128xbf16, #tpu.memory_space<vmem>>, %arg5: memref<16x3xf32, #tpu.memory_space<vmem>>, %arg6: memref<16x4xbf16, #tpu.memory_space<vmem>>, %arg7: memref<16x1xf32, #tpu.memory_space<vmem>>, %arg8: memref<32x16xbf16, #tpu.memory_space<vmem>>, %arg9: memref<32x1xf32, #tpu.memory_space<vmem>>, %arg10: memref<64x32xbf16, #tpu.memory_space<vmem>>, %arg11: memref<64x1xf32, #tpu.memory_space<vmem>>, %arg12: memref<1x1x64x1xf32, #tpu.memory_space<vmem>>, %arg13: memref<64x128xf32, #tpu.memory_space<vmem>>) attributes {dimension_semantics = [#tpu.dimension_semantics<parallel>, #tpu.dimension_semantics<parallel>, #tpu.dimension_semantics<arbitrary>], iteration_bounds = array<i64: 2, 1, 1>, scalar_prefetch = 0 : i64, scratch_operands = 1 : i64, tpu.core_type = #tpu.core_type<tc>, window_params = [{transform_indices = @transform_0, window_bounds = array<i64: 1, 3, 128>}, {transform_indices = @transform_1, window_bounds = array<i64: 1, 4, 128>}, {pipeline_mode = #tpu.pipeline_mode<synchronous>, transform_indices = @transform_2, window_bounds = array<i64: 16, 3>}, {pipeline_mode = #tpu.pipeline_mode<synchronous>, transform_indices = @transform_3, window_bounds = array<i64: 16, 4>}, {pipeline_mode = #tpu.pipeline_mode<synchronous>, transform_indices = @transform_4, window_bounds = array<i64: 16, 1>}, {pipeline_mode = #tpu.pipeline_mode<synchronous>, transform_indices = @transform_5, window_bounds = array<i64: 32, 16>}, {pipeline_mode = #tpu.pipeline_mode<synchronous>, transform_indices = @transform_6, window_bounds = array<i64: 32, 1>}, {pipeline_mode = #tpu.pipeline_mode<synchronous>, transform_indices = @transform_7, window_bounds = array<i64: 64, 32>}, {pipeline_mode = #tpu.pipeline_mode<synchronous>, transform_indices = @transform_8, window_bounds = array<i64: 64, 1>}, {transform_indices = @transform_9, window_bounds = array<i64: 1, 1, 64, 1>}]} {
    %c0_i32 = arith.constant 0 : i32
    %0 = arith.cmpi eq, %arg2, %c0_i32 : i32
    %1 = arith.extui %0 : i1 to i32
    %c0_i32_0 = arith.constant 0 : i32
    %2 = arith.cmpi ne, %1, %c0_i32_0 : i32
    scf.if %2 {
      %cst_31 = arith.constant 0.000000e+00 : f32
      %55 = vector.broadcast %cst_31 : f32 to vector<64x128xf32>
      %c0_32 = arith.constant 0 : index
      %c0_33 = arith.constant 0 : index
      %56 = vector.load %arg13[%c0_32, %c0_33] : memref<64x128xf32, #tpu.memory_space<vmem>>, vector<64x128xf32>
      tpu.vector_store %arg13[%c0_32, %c0_33], %55 {strides = array<i32>} : memref<64x128xf32, #tpu.memory_space<vmem>>, vector<64x128xf32>,
    } else {
    }
    %c0 = arith.constant 0 : index
    %c0_1 = arith.constant 0 : index
    %c0_2 = arith.constant 0 : index
    %3 = vector.load %arg3[%c0, %c0_1, %c0_2] : memref<1x3x128xf32, #tpu.memory_space<vmem>>, vector<1x3x128xf32>
    %4 = vector.shape_cast %3 : vector<1x3x128xf32> to vector<3x128xf32>
    %c0_3 = arith.constant 0 : index
    %c0_4 = arith.constant 0 : index
    %c0_5 = arith.constant 0 : index
    %5 = vector.load %arg4[%c0_3, %c0_4, %c0_5] : memref<1x4x128xbf16, #tpu.memory_space<vmem>>, vector<1x4x128xbf16>
    %6 = vector.shape_cast %5 : vector<1x4x128xbf16> to vector<4x128xbf16>
    %c0_6 = arith.constant 0 : index
    %c0_7 = arith.constant 0 : index
    %7 = vector.load %arg6[%c0_6, %c0_7] : memref<16x4xbf16, #tpu.memory_space<vmem>>, vector<16x4xbf16>
    %cst = arith.constant dense<0.000000e+00> : vector<16x128xf32>
    %8 = tpu.matmul %7, %6, %cst {dimension_numbers = #tpu.dot_dimension_numbers<[1], [0], [0], [1], [0, 0, 1, 1], [], []>} : vector<16x4xbf16>, vector<4x128xbf16>, vector<16x128xf32> -> vector<16x128xf32>
    %c0_8 = arith.constant 0 : index
    %c0_9 = arith.constant 0 : index
    %9 = vector.load %arg5[%c0_8, %c0_9] : memref<16x3xf32, #tpu.memory_space<vmem>>, vector<16x3xf32>
    %10 = vector.extract_strided_slice %9 {offsets = [0, 0], sizes = [16, 1], strides = [1, 1]} : vector<16x3xf32> to vector<16x1xf32>
    %11 = vector.extract_strided_slice %4 {offsets = [0, 0], sizes = [1, 128], strides = [1, 1]} : vector<3x128xf32> to vector<1x128xf32>
    %12 = vector.broadcast %10 : vector<16x1xf32> to vector<16x128xf32>
    %13 = vector.broadcast %11 : vector<1x128xf32> to vector<16x128xf32>
    %14 = arith.mulf %12, %13 : vector<16x128xf32>
    %15 = vector.extract_strided_slice %9 {offsets = [0, 1], sizes = [16, 1], strides = [1, 1]} : vector<16x3xf32> to vector<16x1xf32>
    %16 = vector.extract_strided_slice %4 {offsets = [1, 0], sizes = [1, 128], strides = [1, 1]} : vector<3x128xf32> to vector<1x128xf32>
    %17 = vector.broadcast %15 : vector<16x1xf32> to vector<16x128xf32>
    %18 = vector.broadcast %16 : vector<1x128xf32> to vector<16x128xf32>
    %19 = arith.mulf %17, %18 : vector<16x128xf32>
    %20 = arith.addf %14, %19 : vector<16x128xf32>
    %21 = vector.extract_strided_slice %9 {offsets = [0, 2], sizes = [16, 1], strides = [1, 1]} : vector<16x3xf32> to vector<16x1xf32>
    %22 = vector.extract_strided_slice %4 {offsets = [2, 0], sizes = [1, 128], strides = [1, 1]} : vector<3x128xf32> to vector<1x128xf32>
    %23 = vector.broadcast %21 : vector<16x1xf32> to vector<16x128xf32>
    %24 = vector.broadcast %22 : vector<1x128xf32> to vector<16x128xf32>
    %25 = arith.mulf %23, %24 : vector<16x128xf32>
    %26 = arith.addf %20, %25 : vector<16x128xf32>
    %27 = arith.addf %8, %26 : vector<16x128xf32>
    %c0_10 = arith.constant 0 : index
    %c0_11 = arith.constant 0 : index
    %28 = vector.load %arg7[%c0_10, %c0_11] : memref<16x1xf32, #tpu.memory_space<vmem>>, vector<16x1xf32>
    %29 = vector.broadcast %28 : vector<16x1xf32> to vector<16x128xf32>
    %30 = arith.addf %27, %29 : vector<16x128xf32>
    %cst_12 = arith.constant 0.000000e+00 : f32
    %31 = vector.broadcast %cst_12 : f32 to vector<16x128xf32>
    %32 = arith.maximumf %30, %31 : vector<16x128xf32>
    %c0_13 = arith.constant 0 : index
    %c0_14 = arith.constant 0 : index
    %33 = vector.load %arg8[%c0_13, %c0_14] : memref<32x16xbf16, #tpu.memory_space<vmem>>, vector<32x16xbf16>
    %34 = arith.truncf %32 : vector<16x128xf32> to vector<16x128xbf16>
    %cst_15 = arith.constant dense<0.000000e+00> : vector<32x128xf32>
    %35 = tpu.matmul %33, %34, %cst_15 {dimension_numbers = #tpu.dot_dimension_numbers<[1], [0], [0], [1], [0, 0, 1, 1], [], []>} : vector<32x16xbf16>, vector<16x128xbf16>, vector<32x128xf32> -> vector<32x128xf32>
    %c0_16 = arith.constant 0 : index
    %c0_17 = arith.constant 0 : index
    %36 = vector.load %arg9[%c0_16, %c0_17] : memref<32x1xf32, #tpu.memory_space<vmem>>, vector<32x1xf32>
    %37 = vector.broadcast %36 : vector<32x1xf32> to vector<32x128xf32>
    %38 = arith.addf %35, %37 : vector<32x128xf32>
    %cst_18 = arith.constant 0.000000e+00 : f32
    %39 = vector.broadcast %cst_18 : f32 to vector<32x128xf32>
    %40 = arith.maximumf %38, %39 : vector<32x128xf32>
    %c0_19 = arith.constant 0 : index
    %c0_20 = arith.constant 0 : index
    %41 = vector.load %arg10[%c0_19, %c0_20] : memref<64x32xbf16, #tpu.memory_space<vmem>>, vector<64x32xbf16>
    %42 = arith.truncf %40 : vector<32x128xf32> to vector<32x128xbf16>
    %cst_21 = arith.constant dense<0.000000e+00> : vector<64x128xf32>
    %43 = tpu.matmul %41, %42, %cst_21 {dimension_numbers = #tpu.dot_dimension_numbers<[1], [0], [0], [1], [0, 0, 1, 1], [], []>} : vector<64x32xbf16>, vector<32x128xbf16>, vector<64x128xf32> -> vector<64x128xf32>
    %c0_22 = arith.constant 0 : index
    %c0_23 = arith.constant 0 : index
    %44 = vector.load %arg11[%c0_22, %c0_23] : memref<64x1xf32, #tpu.memory_space<vmem>>, vector<64x1xf32>
    %45 = vector.broadcast %44 : vector<64x1xf32> to vector<64x128xf32>
    %46 = arith.addf %43, %45 : vector<64x128xf32>
    %cst_24 = arith.constant 0.000000e+00 : f32
    %47 = vector.broadcast %cst_24 : f32 to vector<64x128xf32>
    %48 = arith.maximumf %46, %47 : vector<64x128xf32>
    %c0_25 = arith.constant 0 : index
    %c0_26 = arith.constant 0 : index
    %49 = vector.load %arg13[%c0_25, %c0_26] : memref<64x128xf32, #tpu.memory_space<vmem>>, vector<64x128xf32>
    %50 = arith.maximumf %49, %48 : vector<64x128xf32>
    %c0_27 = arith.constant 0 : index
    %c0_28 = arith.constant 0 : index
    %51 = vector.load %arg13[%c0_27, %c0_28] : memref<64x128xf32, #tpu.memory_space<vmem>>, vector<64x128xf32>
    tpu.vector_store %arg13[%c0_27, %c0_28], %50 {strides = array<i32>} : memref<64x128xf32, #tpu.memory_space<vmem>>, vector<64x128xf32>,
    %c0_i32_29 = arith.constant 0 : i32
    %52 = arith.cmpi eq, %arg2, %c0_i32_29 : i32
    %53 = arith.extui %52 : i1 to i32
    %c0_i32_30 = arith.constant 0 : i32
    %54 = arith.cmpi ne, %53, %c0_i32_30 : i32
    scf.if %54 {
      %c0_31 = arith.constant 0 : index
      %c0_32 = arith.constant 0 : index
      %55 = vector.load %arg13[%c0_31, %c0_32] : memref<64x128xf32, #tpu.memory_space<vmem>>, vector<64x128xf32>
      %cst_33 = arith.constant dense<0xFF800000> : vector<64xf32>
      %56 = vector.multi_reduction <maximumf>, %55, %cst_33 [1] : vector<64x128xf32> to vector<64xf32>
      %57 = vector.shape_cast %56 : vector<64xf32> to vector<64x1xf32>
      %c0_34 = arith.constant 0 : index
      %c0_35 = arith.constant 0 : index
      %c0_36 = arith.constant 0 : index
      %c0_37 = arith.constant 0 : index
      %58 = vector.load %arg12[%c0_34, %c0_35, %c0_36, %c0_37] : memref<1x1x64x1xf32, #tpu.memory_space<vmem>>, vector<1x1x64x1xf32>
      %59 = vector.shape_cast %58 : vector<1x1x64x1xf32> to vector<64x1xf32>
      %60 = vector.shape_cast %57 : vector<64x1xf32> to vector<1x1x64x1xf32>
      tpu.vector_store %arg12[%c0_34, %c0_35, %c0_36, %c0_37], %60 {strides = array<i32>} : memref<1x1x64x1xf32, #tpu.memory_space<vmem>>, vector<1x1x64x1xf32>,
    } else {
    }
    return
  }
  func.func @transform_0(%arg0: i32, %arg1: i32, %arg2: i32) -> (i32, i32, i32) {
    %c1_i32 = arith.constant 1 : i32
    %0 = arith.muli %arg1, %c1_i32 : i32
    %1 = arith.addi %0, %arg2 : i32
    %c0_i32 = arith.constant 0 : i32
    %c0_i32_0 = arith.constant 0 : i32
    return %arg0, %c0_i32, %1 : i32, i32, i32
  }
  func.func @transform_1(%arg0: i32, %arg1: i32, %arg2: i32) -> (i32, i32, i32) {
    %c1_i32 = arith.constant 1 : i32
    %0 = arith.muli %arg1, %c1_i32 : i32
    %1 = arith.addi %0, %arg2 : i32
    %c0_i32 = arith.constant 0 : i32
    %c0_i32_0 = arith.constant 0 : i32
    return %arg0, %c0_i32, %1 : i32, i32, i32
  }
  func.func @transform_2(%arg0: i32, %arg1: i32, %arg2: i32) -> (i32, i32) {
    %c0_i32 = arith.constant 0 : i32
    %c0_i32_0 = arith.constant 0 : i32
    %c0_i32_1 = arith.constant 0 : i32
    return %c0_i32, %c0_i32_0 : i32, i32
  }
  func.func @transform_3(%arg0: i32, %arg1: i32, %arg2: i32) -> (i32, i32) {
    %c0_i32 = arith.constant 0 : i32
    %c0_i32_0 = arith.constant 0 : i32
    %c0_i32_1 = arith.constant 0 : i32
    return %c0_i32, %c0_i32_0 : i32, i32
  }
  func.func @transform_4(%arg0: i32, %arg1: i32, %arg2: i32) -> (i32, i32) {
    %c0_i32 = arith.constant 0 : i32
    %c0_i32_0 = arith.constant 0 : i32
    %c0_i32_1 = arith.constant 0 : i32
    return %c0_i32, %c0_i32_0 : i32, i32
  }
  func.func @transform_5(%arg0: i32, %arg1: i32, %arg2: i32) -> (i32, i32) {
    %c0_i32 = arith.constant 0 : i32
    %c0_i32_0 = arith.constant 0 : i32
    %c0_i32_1 = arith.constant 0 : i32
    return %c0_i32, %c0_i32_0 : i32, i32
  }
  func.func @transform_6(%arg0: i32, %arg1: i32, %arg2: i32) -> (i32, i32) {
    %c0_i32 = arith.constant 0 : i32
    %c0_i32_0 = arith.constant 0 : i32
    %c0_i32_1 = arith.constant 0 : i32
    return %c0_i32, %c0_i32_0 : i32, i32
  }
  func.func @transform_7(%arg0: i32, %arg1: i32, %arg2: i32) -> (i32, i32) {
    %c0_i32 = arith.constant 0 : i32
    %c0_i32_0 = arith.constant 0 : i32
    %c0_i32_1 = arith.constant 0 : i32
    return %c0_i32, %c0_i32_0 : i32, i32
  }
  func.func @transform_8(%arg0: i32, %arg1: i32, %arg2: i32) -> (i32, i32) {
    %c0_i32 = arith.constant 0 : i32
    %c0_i32_0 = arith.constant 0 : i32
    %c0_i32_1 = arith.constant 0 : i32
    return %c0_i32, %c0_i32_0 : i32, i32
  }
  func.func @transform_9(%arg0: i32, %arg1: i32, %arg2: i32) -> (i32, i32, i32, i32) {
    %c0_i32 = arith.constant 0 : i32
    %c0_i32_0 = arith.constant 0 : i32
    %c0_i32_1 = arith.constant 0 : i32
    return %arg0, %arg1, %c0_i32, %c0_i32_0 : i32, i32, i32, i32
  }
}

</mosaic_0001>

<llo_original>
// kernel: tpu_custom_call.1
$region0: #{tpu_custom_call.1}
  #allocation0 [shape = 'u32[]', space=smem, size = 0x4, offset = 0x4, fixed_abs, tag = 'smem constant byte address 0x4 - core index']
  #allocation1 [shape = 'u32[144,128]{1,0:T(1,128)}', space=vmem, size = 0x12000, scoped, tag = 'internal scratch']
  #allocation2 [shape = 'f32[64,128]{1,0:T(8,128)}', space=vmem, size = 0x8000, scoped, tag = 'scratch operand']
  %s0 = inlined_call_operand.vmem [shape: f32[2,3,128], index: 0, kind: input, shape index: {}]
  %s1 = inlined_call_operand.vmem [shape: bf16[2,4,128], index: 1, kind: input, shape index: {}]
  %s2 = inlined_call_operand.vmem [shape: f32[16,3], index: 2, kind: input, shape index: {}]
  %s3 = inlined_call_operand.vmem [shape: bf16[16,4], index: 3, kind: input, shape index: {}]
  %s4 = inlined_call_operand.vmem [shape: f32[16,1], index: 4, kind: input, shape index: {}]
  %s5 = inlined_call_operand.vmem [shape: bf16[32,16], index: 5, kind: input, shape index: {}]
  %s6 = inlined_call_operand.vmem [shape: f32[32,1], index: 6, kind: input, shape index: {}]
  %s7 = inlined_call_operand.vmem [shape: bf16[64,32], index: 7, kind: input, shape index: {}]
  %s8 = inlined_call_operand.vmem [shape: f32[64,1], index: 8, kind: input, shape index: {}]
  %s9 = inlined_call_operand.vmem [shape: f32[2,1,64,1], index: 9, kind: output, shape index: {}]
  %s10 = sld [smem:[#allocation0]]
  $region77: #{tpu_custom_call.1} parent=0
    _
  %s12 = ssub.s32 1, %s10
  %s13 = scalar_select 0, %s12, %s10
  loop: start=0, step=1, limit=4
  $region2: #{tpu_custom_call.1} parent=0 // loop_pre_header
    _
  $region3: #{tpu_custom_call.1} parent=0 // loop_header
    %s15 = sphi 0, %s19
    %p16 = scmp.ge.s32.totalorder %s15, 4
    %s22 = sphi 0, %s41
    %s23 = sphi 0, %s37
    %s24 = sphi 0, %s33
    %s25 = sphi 0, %s22
    %s26 = sphi 0, %s23
    %s27 = sphi 0, %s24
    %s28 = sphi 0, %s25
    %s29 = sphi 0, %s26
    %s30 = sphi 0, %s27
    %s48 = sphi 0, %s50
    %s51 = sphi 0, %s48
    %s52 = sphi 0, %s51
    %s68 = sphi 0, %s52
    %s78 = sphi 0, %s80
    %s81 = sphi 0, %s78
    %s82 = sphi 0, %s81
    %s98 = sphi 0, %s82
    %s102 = sphi 0, %s102
    %s104 = sphi 0, %s102
    %s105 = sphi 0, %s104
    %s119 = sphi 0, %s105
    %s123 = sphi 0, %s123
    %s125 = sphi 0, %s123
    %s126 = sphi 0, %s125
    %s140 = sphi 0, %s126
    %s144 = sphi 0, %s144
    %s146 = sphi 0, %s144
    %s147 = sphi 0, %s146
    %s161 = sphi 0, %s147
    %s165 = sphi 0, %s165
    %s167 = sphi 0, %s165
    %s168 = sphi 0, %s167
    %s182 = sphi 0, %s168
    %s186 = sphi 0, %s186
    %s188 = sphi 0, %s186
    %s189 = sphi 0, %s188
    %s203 = sphi 0, %s189
    %s207 = sphi 0, %s207
    %s209 = sphi 0, %s207
    %s210 = sphi 0, %s209
    %s224 = sphi 0, %s210
    %s228 = sphi 0, %s228
    %s230 = sphi 0, %s228
    %s231 = sphi 0, %s230
    %s245 = sphi 0, %s231
    %s253 = sphi 0, %s255
    %s256 = sphi 0, %s253
    %s257 = sphi 0, %s256
    %s273 = sphi 0, %s257
  $region4: #{tpu_custom_call.1} parent=0 // loop_header_branch
    %18 = sbr.rel (%p16) target = $region8
  $region5: #{tpu_custom_call.1} parent=0 // loop_body
    %s20 = ssub.s32 %s15, 1
    %s21 = ssub.s32 %s15, 2
    %s31 = sadd.s32 1, %s24
    %p32 = scmp.ge.s32.totalorder %s31, 1
    %s33 = scalar_select %p32, 0, %s31
    %s34 = sadd.s32 1, %s23
    %s35 = scalar_select %p32, %s34, %s23
    %p36 = scmp.ge.s32.totalorder %s35, 1
    %s37 = scalar_select %p36, 0, %s35
    %s38 = sadd.s32 1, %s22
    %s39 = scalar_select %p36, %s38, %s22
    %p40 = scmp.ge.s32.totalorder %s39, 2
    %s41 = scalar_select %p40, 0, %s39
    %s42 = sadd.s32 %s23, %s24
    %s43 = sadd.s32 %s37, %s33
    %s44 = ssub.s32 %s22, %s41
    %s45 = ssub.s32 %s42, %s43
    %s46 = sor.u32 %s44, %s45
    %p47 = scmp.eq.s32.totalorder %s46, 0
    %s49 = sadd.s32 %s48, 1
    %s50 = scalar_select %p47, %s48, %s49
    %p53 = pneg %p47
    %p54 = scmp.eq.s32.totalorder %s15, 1
    %p55 = por %p53, %p54
    %p56 = scmp.ne.s32.totalorder %s48, %s51
    %p57 = scmp.eq.s32.totalorder %s15, 0
    %p58 = por %p56, %p57
    %p59 = scmp.ne.s32.totalorder %s48, %s51
    %p60 = scmp.eq.s32.totalorder %s20, 1
    %p61 = por %p59, %p60
    %p62 = scmp.ne.s32.totalorder %s51, %s52
    %p63 = scmp.eq.s32.totalorder %s20, 0
    %p64 = por %p62, %p63
    %p65 = scmp.ne.s32.totalorder %s51, %s52
    %p66 = scmp.eq.s32.totalorder %s21, 1
    %p67 = por %p65, %p66
    %p69 = scmp.ne.s32.totalorder %s52, %s68
    %p70 = scmp.eq.s32.totalorder %s21, 0
    %p71 = por %p69, %p70
    %s72 = sadd.s32 %s23, %s24
    %s73 = sadd.s32 %s37, %s33
    %s74 = ssub.s32 %s22, %s41
    %s75 = ssub.s32 %s72, %s73
    %s76 = sor.u32 %s74, %s75
    %p77 = scmp.eq.s32.totalorder %s76, 0
    %s79 = sadd.s32 %s78, 1
    %s80 = scalar_select %p77, %s78, %s79
    %p83 = pneg %p77
    %p84 = scmp.eq.s32.totalorder %s15, 1
    %p85 = por %p83, %p84
    %p86 = scmp.ne.s32.totalorder %s78, %s81
    %p87 = scmp.eq.s32.totalorder %s15, 0
    %p88 = por %p86, %p87
    %p89 = scmp.ne.s32.totalorder %s78, %s81
    %p90 = scmp.eq.s32.totalorder %s20, 1
    %p91 = por %p89, %p90
    %p92 = scmp.ne.s32.totalorder %s81, %s82
    %p93 = scmp.eq.s32.totalorder %s20, 0
    %p94 = por %p92, %p93
    %p95 = scmp.ne.s32.totalorder %s81, %s82
    %p96 = scmp.eq.s32.totalorder %s21, 1
    %p97 = por %p95, %p96
    %p99 = scmp.ne.s32.totalorder %s82, %s98
    %p100 = scmp.eq.s32.totalorder %s21, 0
    %p101 = por %p99, %p100
    %s103 = sadd.s32 %s102, 1
    %p106 = scmp.eq.s32.totalorder %s15, 1
    %p107 = scmp.ne.s32.totalorder %s102, %s104
    %p108 = scmp.eq.s32.totalorder %s15, 0
    %p109 = por %p107, %p108
    %p110 = scmp.ne.s32.totalorder %s102, %s104
    %p111 = scmp.eq.s32.totalorder %s20, 1
    %p112 = por %p110, %p111
    %p113 = scmp.ne.s32.totalorder %s104, %s105
    %p114 = scmp.eq.s32.totalorder %s20, 0
    %p115 = por %p113, %p114
    %p116 = scmp.ne.s32.totalorder %s104, %s105
    %p117 = scmp.eq.s32.totalorder %s21, 1
    %p118 = por %p116, %p117
    %p120 = scmp.ne.s32.totalorder %s105, %s119
    %p121 = scmp.eq.s32.totalorder %s21, 0
    %p122 = por %p120, %p121
    %s124 = sadd.s32 %s123, 1
    %p127 = scmp.eq.s32.totalorder %s15, 1
    %p128 = scmp.ne.s32.totalorder %s123, %s125
    %p129 = scmp.eq.s32.totalorder %s15, 0
    %p130 = por %p128, %p129
    %p131 = scmp.ne.s32.totalorder %s123, %s125
    %p132 = scmp.eq.s32.totalorder %s20, 1
    %p133 = por %p131, %p132
    %p134 = scmp.ne.s32.totalorder %s125, %s126
    %p135 = scmp.eq.s32.totalorder %s20, 0
    %p136 = por %p134, %p135
    %p137 = scmp.ne.s32.totalorder %s125, %s126
    %p138 = scmp.eq.s32.totalorder %s21, 1
    %p139 = por %p137, %p138
    %p141 = scmp.ne.s32.totalorder %s126, %s140
    %p142 = scmp.eq.s32.totalorder %s21, 0
    %p143 = por %p141, %p142
    %s145 = sadd.s32 %s144, 1
    %p148 = scmp.eq.s32.totalorder %s15, 1
    %p149 = scmp.ne.s32.totalorder %s144, %s146
    %p150 = scmp.eq.s32.totalorder %s15, 0
    %p151 = por %p149, %p150
    %p152 = scmp.ne.s32.totalorder %s144, %s146
    %p153 = scmp.eq.s32.totalorder %s20, 1
    %p154 = por %p152, %p153
    %p155 = scmp.ne.s32.totalorder %s146, %s147
    %p156 = scmp.eq.s32.totalorder %s20, 0
    %p157 = por %p155, %p156
    %p158 = scmp.ne.s32.totalorder %s146, %s147
    %p159 = scmp.eq.s32.totalorder %s21, 1
    %p160 = por %p158, %p159
    %p162 = scmp.ne.s32.totalorder %s147, %s161
    %p163 = scmp.eq.s32.totalorder %s21, 0
    %p164 = por %p162, %p163
    %s166 = sadd.s32 %s165, 1
    %p169 = scmp.eq.s32.totalorder %s15, 1
    %p170 = scmp.ne.s32.totalorder %s165, %s167
    %p171 = scmp.eq.s32.totalorder %s15, 0
    %p172 = por %p170, %p171
    %p173 = scmp.ne.s32.totalorder %s165, %s167
    %p174 = scmp.eq.s32.totalorder %s20, 1
    %p175 = por %p173, %p174
    %p176 = scmp.ne.s32.totalorder %s167, %s168
    %p177 = scmp.eq.s32.totalorder %s20, 0
    %p178 = por %p176, %p177
    %p179 = scmp.ne.s32.totalorder %s167, %s168
    %p180 = scmp.eq.s32.totalorder %s21, 1
    %p181 = por %p179, %p180
    %p183 = scmp.ne.s32.totalorder %s168, %s182
    %p184 = scmp.eq.s32.totalorder %s21, 0
    %p185 = por %p183, %p184
    %s187 = sadd.s32 %s186, 1
    %p190 = scmp.eq.s32.totalorder %s15, 1
    %p191 = scmp.ne.s32.totalorder %s186, %s188
    %p192 = scmp.eq.s32.totalorder %s15, 0
    %p193 = por %p191, %p192
    %p194 = scmp.ne.s32.totalorder %s186, %s188
    %p195 = scmp.eq.s32.totalorder %s20, 1
    %p196 = por %p194, %p195
    %p197 = scmp.ne.s32.totalorder %s188, %s189
    %p198 = scmp.eq.s32.totalorder %s20, 0
    %p199 = por %p197, %p198
    %p200 = scmp.ne.s32.totalorder %s188, %s189
    %p201 = scmp.eq.s32.totalorder %s21, 1
    %p202 = por %p200, %p201
    %p204 = scmp.ne.s32.totalorder %s189, %s203
    %p205 = scmp.eq.s32.totalorder %s21, 0
    %p206 = por %p204, %p205
    %s208 = sadd.s32 %s207, 1
    %p211 = scmp.eq.s32.totalorder %s15, 1
    %p212 = scmp.ne.s32.totalorder %s207, %s209
    %p213 = scmp.eq.s32.totalorder %s15, 0
    %p214 = por %p212, %p213
    %p215 = scmp.ne.s32.totalorder %s207, %s209
    %p216 = scmp.eq.s32.totalorder %s20, 1
    %p217 = por %p215, %p216
    %p218 = scmp.ne.s32.totalorder %s209, %s210
    %p219 = scmp.eq.s32.totalorder %s20, 0
    %p220 = por %p218, %p219
    %p221 = scmp.ne.s32.totalorder %s209, %s210
    %p222 = scmp.eq.s32.totalorder %s21, 1
    %p223 = por %p221, %p222
    %p225 = scmp.ne.s32.totalorder %s210, %s224
    %p226 = scmp.eq.s32.totalorder %s21, 0
    %p227 = por %p225, %p226
    %s229 = sadd.s32 %s228, 1
    %p232 = scmp.eq.s32.totalorder %s15, 1
    %p233 = scmp.ne.s32.totalorder %s228, %s230
    %p234 = scmp.eq.s32.totalorder %s15, 0
    %p235 = por %p233, %p234
    %p236 = scmp.ne.s32.totalorder %s228, %s230
    %p237 = scmp.eq.s32.totalorder %s20, 1
    %p238 = por %p236, %p237
    %p239 = scmp.ne.s32.totalorder %s230, %s231
    %p240 = scmp.eq.s32.totalorder %s20, 0
    %p241 = por %p239, %p240
    %p242 = scmp.ne.s32.totalorder %s230, %s231
    %p243 = scmp.eq.s32.totalorder %s21, 1
    %p244 = por %p242, %p243
    %p246 = scmp.ne.s32.totalorder %s231, %s245
    %p247 = scmp.eq.s32.totalorder %s21, 0
    %p248 = por %p246, %p247
    %s249 = ssub.s32 %s22, %s41
    %s250 = ssub.s32 %s23, %s37
    %s251 = sor.u32 %s249, %s250
    %p252 = scmp.eq.s32.totalorder %s251, 0
    %s254 = sadd.s32 %s253, 1
    %s255 = scalar_select %p252, %s253, %s254
    %p258 = pneg %p252
    %p259 = scmp.eq.s32.totalorder %s15, 1
    %p260 = por %p258, %p259
    %p261 = scmp.ne.s32.totalorder %s253, %s256
    %p262 = scmp.eq.s32.totalorder %s15, 0
    %p263 = por %p261, %p262
    %p264 = scmp.ne.s32.totalorder %s253, %s256
    %p265 = scmp.eq.s32.totalorder %s20, 1
    %p266 = por %p264, %p265
    %p267 = scmp.ne.s32.totalorder %s256, %s257
    %p268 = scmp.eq.s32.totalorder %s20, 0
    %p269 = por %p267, %p268
    %p270 = scmp.ne.s32.totalorder %s256, %s257
    %p271 = scmp.eq.s32.totalorder %s21, 1
    %p272 = por %p270, %p271
    %p274 = scmp.ne.s32.totalorder %s257, %s273
    %p275 = scmp.eq.s32.totalorder %s21, 0
    %p276 = por %p274, %p275
    %p277 = scmp.le.s32.totalorder 1, %s15
    %p278 = scmp.lt.s32.totalorder %s15, 3
    %p279 = pnand %p277, %p278
    %p280 = pneg %p279
    // Predicated region
    $region9: #{tpu_custom_call.1} parent=5 // pred_check
      _
    $region10: #{tpu_custom_call.1} parent=5 // pred_check_branch
      %282 = sbr.rel (%p279) target = $region12
    $region11: #{tpu_custom_call.1} parent=5 // pred_region
      %s283 = ssub.s32 %s15, 1
      // Predicated region
      $region13: #{tpu_custom_call.1} parent=11 // pred_check
        %p284 = pneg %p115
      $region14: #{tpu_custom_call.1} parent=11 // pred_check_branch
        %286 = sbr.rel (%p284) target = $region16
      $region15: #{tpu_custom_call.1} parent=11 // pred_region
        _
      $region16: #{tpu_custom_call.1} parent=11 // pred_fallthru
        _
      // Predicated region
      $region17: #{tpu_custom_call.1} parent=11 // pred_check
        %p287 = pneg %p136
      $region18: #{tpu_custom_call.1} parent=11 // pred_check_branch
        %289 = sbr.rel (%p287) target = $region20
      $region19: #{tpu_custom_call.1} parent=11 // pred_region
        _
      $region20: #{tpu_custom_call.1} parent=11 // pred_fallthru
        _
      // Predicated region
      $region21: #{tpu_custom_call.1} parent=11 // pred_check
        %p290 = pneg %p157
      $region22: #{tpu_custom_call.1} parent=11 // pred_check_branch
        %292 = sbr.rel (%p290) target = $region24
      $region23: #{tpu_custom_call.1} parent=11 // pred_region
        _
      $region24: #{tpu_custom_call.1} parent=11 // pred_fallthru
        _
      // Predicated region
      $region25: #{tpu_custom_call.1} parent=11 // pred_check
        %p293 = pneg %p178
      $region26: #{tpu_custom_call.1} parent=11 // pred_check_branch
        %295 = sbr.rel (%p293) target = $region28
      $region27: #{tpu_custom_call.1} parent=11 // pred_region
        _
      $region28: #{tpu_custom_call.1} parent=11 // pred_fallthru
        _
      // Predicated region
      $region29: #{tpu_custom_call.1} parent=11 // pred_check
        %p296 = pneg %p199
      $region30: #{tpu_custom_call.1} parent=11 // pred_check_branch
        %298 = sbr.rel (%p296) target = $region32
      $region31: #{tpu_custom_call.1} parent=11 // pred_region
        _
      $region32: #{tpu_custom_call.1} parent=11 // pred_fallthru
        _
      // Predicated region
      $region33: #{tpu_custom_call.1} parent=11 // pred_check
        %p299 = pneg %p220
      $region34: #{tpu_custom_call.1} parent=11 // pred_check_branch
        %301 = sbr.rel (%p299) target = $region36
      $region35: #{tpu_custom_call.1} parent=11 // pred_region
        _
      $region36: #{tpu_custom_call.1} parent=11 // pred_fallthru
        _
      // Predicated region
      $region37: #{tpu_custom_call.1} parent=11 // pred_check
        %p302 = pneg %p241
      $region38: #{tpu_custom_call.1} parent=11 // pred_check_branch
        %304 = sbr.rel (%p302) target = $region40
      $region39: #{tpu_custom_call.1} parent=11 // pred_region
        _
      $region40: #{tpu_custom_call.1} parent=11 // pred_fallthru
        _
    $region12: #{tpu_custom_call.1} parent=5 // pred_fallthru
      _
    %p305 = scmp.lt.s32.totalorder %s15, 2
    // Predicated region
    $region41: #{tpu_custom_call.1} parent=5 // pred_check
      %p306 = pneg %p305
    $region42: #{tpu_custom_call.1} parent=5 // pred_check_branch
      %308 = sbr.rel (%p306) target = $region44
    $region43: #{tpu_custom_call.1} parent=5 // pred_region
      // Predicated region
      $region45: #{tpu_custom_call.1} parent=43 // pred_check
        %p309 = pneg %p58
      $region46: #{tpu_custom_call.1} parent=43 // pred_check_branch
        %311 = sbr.rel (%p309) target = $region48
      $region47: #{tpu_custom_call.1} parent=43 // pred_region
        %s312 = sadd.s32 %s23, %s24
        %p313 = scmp.lt.s32.totalorder %s22, 1
        %s314 = scalar_select %p313, %s22, 1
        %p315 = scmp.lt.s32.totalorder %s312, 0
        %s316 = scalar_select %p315, %s312, 0
        %s317 = sadd.s32 %s316, %s314
        %s318 = smul.addr %s317, 4
        %s319 = scalar_lea.vmem %s0, %s318
        %s320 = sadd.s32 %s23, %s24
      $region48: #{tpu_custom_call.1} parent=43 // pred_fallthru
        _
      // Predicated region
      $region49: #{tpu_custom_call.1} parent=43 // pred_check
        %p321 = pneg %p88
      $region50: #{tpu_custom_call.1} parent=43 // pred_check_branch
        %323 = sbr.rel (%p321) target = $region52
      $region51: #{tpu_custom_call.1} parent=43 // pred_region
        %s324 = sadd.s32 %s23, %s24
        %p325 = scmp.lt.s32.totalorder %s22, 1
        %s326 = scalar_select %p325, %s22, 1
        %p327 = scmp.lt.s32.totalorder %s324, 0
        %s328 = scalar_select %p327, %s324, 0
        %s329 = sadd.s32 %s328, %s326
        %s330 = smul.addr %s329, 2
        %s331 = scalar_lea.vmem %s1, %s330
        %s332 = sadd.s32 %s23, %s24
      $region52: #{tpu_custom_call.1} parent=43 // pred_fallthru
        _
    $region44: #{tpu_custom_call.1} parent=5 // pred_fallthru
      _
    %p333 = scmp.le.s32.totalorder 1, %s15
    %p334 = scmp.lt.s32.totalorder %s15, 3
    %p335 = pnand %p333, %p334
    %p336 = pneg %p335
    // Predicated region
    $region53: #{tpu_custom_call.1} parent=5 // pred_check
      _
    $region54: #{tpu_custom_call.1} parent=5 // pred_check_branch
      %338 = sbr.rel (%p335) target = $region56
    $region55: #{tpu_custom_call.1} parent=5 // pred_region
      %s339 = ssub.s32 %s15, 1
      %s340 = sadd.s32 %s26, %s27
      %p341 = scmp.lt.s32.totalorder %s25, 1
      %s342 = scalar_select %p341, %s25, 1
      %p343 = scmp.lt.s32.totalorder %s340, 0
      %s344 = scalar_select %p343, %s340, 0
      %s345 = sadd.s32 %s344, %s342
      %s346 = smul.addr %s345, 4
      %s347 = scalar_lea.vmem %s0, %s346
      %p348 = pneg %p64
      %p349 = pneg %p61
      %s350 = sadd.s32 %s26, %s27
      %p351 = scmp.lt.s32.totalorder %s25, 1
      %s352 = scalar_select %p351, %s25, 1
      %p353 = scmp.lt.s32.totalorder %s350, 0
      %s354 = scalar_select %p353, %s350, 0
      %s355 = sadd.s32 %s354, %s352
      %s356 = smul.addr %s355, 2
      %s357 = scalar_lea.vmem %s1, %s356
      %p358 = pneg %p94
      %p359 = pneg %p91
      %p360 = pneg %p115
      %p361 = pneg %p112
      %p362 = pneg %p136
      %p363 = pneg %p133
      %p364 = pneg %p157
      %p365 = pneg %p154
      %p366 = pneg %p178
      %p367 = pneg %p175
      %p368 = pneg %p199
      %p369 = pneg %p196
      %p370 = pneg %p220
      %p371 = pneg %p217
      %p372 = pneg %p241
      %p373 = pneg %p238
      %p374 = pneg %p269
      %p375 = pneg %p266
      %p376 = scmp.lt.s32.totalorder %s25, 1
      %s377 = scalar_select %p376, %s25, 1
      %p378 = scmp.lt.s32.totalorder %s26, 0
      %s379 = scalar_select %p378, %s26, 0
      %s380 = smul.addr %s379, 8
      %s381 = smul.addr %s377, 8
      %s382 = sadd.s32 %s380, %s381
      %s383 = smul.addr %s382, 8
      %s384 = scalar_lea.vmem %s9, %s383
      %s385 = sadd.s32 %s26, %s27
      %p386 = scmp.lt.s32.totalorder %s25, 1
      %s387 = scalar_select %p386, %s25, 1
      %p388 = scmp.lt.s32.totalorder %s385, 0
      %s389 = scalar_select %p388, %s385, 0
      %s390 = sadd.s32 %s389, %s387
      %s391 = smul.addr %s390, 4
      %s392 = scalar_lea.vmem %s0, %s391
      %s393 = sadd.s32 %s26, %s27
      %s394 = sadd.s32 %s26, %s27
      %p395 = scmp.lt.s32.totalorder %s25, 1
      %s396 = scalar_select %p395, %s25, 1
      %p397 = scmp.lt.s32.totalorder %s394, 0
      %s398 = scalar_select %p397, %s394, 0
      %s399 = sadd.s32 %s398, %s396
      %s400 = smul.addr %s399, 2
      %s401 = scalar_lea.vmem %s1, %s400
      %s402 = sadd.s32 %s26, %s27
      %p403 = scmp.lt.s32.totalorder %s25, 1
      %s404 = scalar_select %p403, %s25, 1
      %p405 = scmp.lt.s32.totalorder %s26, 0
      %s406 = scalar_select %p405, %s26, 0
      %s407 = smul.addr %s406, 8
      %s408 = smul.addr %s404, 8
      %s409 = sadd.s32 %s407, %s408
      %s410 = smul.addr %s409, 8
      %s411 = scalar_lea.vmem %s9, %s410
      %p413 = scmp.eq.s32.totalorder %s27, 0
      // Predicated region
      $region57: #{tpu_custom_call.1} parent=55 // pred_check
        %p414 = pneg %p413
      $region58: #{tpu_custom_call.1} parent=55 // pred_check_branch
        %416 = sbr.rel (%p414) target = $region60
      $region59: #{tpu_custom_call.1} parent=55 // pred_region
        %417 = vst [vmem:[#allocation2] sm:$0xff] 0.0
        %418 = vst [vmem:[#allocation2 + $0x8] sm:$0xff] 0.0
        %419 = vst [vmem:[#allocation2 + $0x10] sm:$0xff] 0.0
        %420 = vst [vmem:[#allocation2 + $0x18] sm:$0xff] 0.0
        %421 = vst [vmem:[#allocation2 + $0x20] sm:$0xff] 0.0
        %422 = vst [vmem:[#allocation2 + $0x28] sm:$0xff] 0.0
        %423 = vst [vmem:[#allocation2 + $0x30] sm:$0xff] 0.0
        %424 = vst [vmem:[#allocation2 + $0x38] sm:$0xff] 0.0
      $region60: #{tpu_custom_call.1} parent=55 // pred_fallthru
        _
      %v425 = vld [vmem:[%s392] sm:$0x7]
      %v426 = vld [vmem:[%s401] sm:$0x3]
      %v427 = vld [vmem:[%s3] sm:$0xf]
      %v428 = vld [vmem:[%s3 + $0x4] sm:$0xf]
      %v429 = vld [vmem:[%s2] sm:$0xff]
      %v430 = vld [vmem:[%s2 + $0x8] sm:$0xff]
      %432 = vset.pattern.permute.xlu0 0
      %433 = vperm.xlu0 %432, %v429
      %v434 = vpop.permute.xlu0 %433
      %437 = vset.pattern.permute.xlu0 0
      %438 = vperm.xlu0 %437, %v430
      %v439 = vpop.permute.xlu0 %438
      %v441 = vlaneseq
      %v442 = vshrl.u32 %v441, 7
      %v443 = vsub.s32 0, %v442
      %v444 = vrot.slane %v425, %v443
      %v445 = vmul.f32 %v434, %v444
      %v446 = vmul.f32 %v439, %v444
      %447 = vset.pattern.permute.xlu0 1
      %448 = vperm.xlu0 %447, %v429
      %v449 = vpop.permute.xlu0 %448
      %451 = vset.pattern.permute.xlu0 1
      %452 = vperm.xlu0 %451, %v430
      %v453 = vpop.permute.xlu0 %452
      %v455 = vlaneseq
      %v456 = vshrl.u32 %v455, 7
      %v457 = vsub.s32 1, %v456
      %v458 = vrot.slane %v425, %v457
      %v459 = vmul.f32 %v449, %v458
      %v460 = vmul.f32 %v453, %v458
      %v461 = vadd.f32 %v445, %v459
      %v462 = vadd.f32 %v446, %v460
      %463 = vset.pattern.permute.xlu0 2
      %464 = vperm.xlu0 %463, %v429
      %v465 = vpop.permute.xlu0 %464
      %467 = vset.pattern.permute.xlu0 2
      %468 = vperm.xlu0 %467, %v430
      %v469 = vpop.permute.xlu0 %468
      %v471 = vlaneseq
      %v472 = vshrl.u32 %v471, 7
      %v473 = vsub.s32 2, %v472
      %v474 = vrot.slane %v425, %v473
      %v475 = vmul.f32 %v465, %v474
      %v476 = vmul.f32 %v469, %v474
      %v477 = vadd.f32 %v461, %v475
      %v478 = vadd.f32 %v462, %v476
      %v481 = vunpack.c.l.b16 %v427
      %v482 = vunpack.c.l.b16 %v428
      %v483 = vpack.c.b16 %v482, %v481
      %vm484 = vcmask 31744
      %v486 = vsel %vm484, %v483, 0
      %vm488 = vcmask 1041408
      %v490 = vsel %vm488, %v426, 0
      %492 = vmatprep.subr.bf16.mxu0 0
      %493 = vmatpush1.bf16.msra.mxu0 0
      %494 = vmatprep.subr.bf16.mxu0 0
      %495 = vmatpush1.bf16.msra.mxu0 0
      %496 = vmatprep.subr.bf16.mxu0 0
      %497 = vmatpush1.bf16.msra.mxu0 0
      %498 = vmatprep.subr.bf16.mxu0 0
      %499 = vmatpush1.bf16.msra.mxu0 0
      %500 = vmatprep.subr.bf16.mxu0 0
      %501 = vmatpush1.bf16.msra.mxu0 0
      %502 = vmatprep.subr.bf16.mxu0 0
      %503 = vmatpush1.bf16.msra.mxu0 0
      %504 = vmatprep.subr.bf16.mxu0 0
      %505 = vmatpush1.bf16.msra.mxu0 0
      %506 = vmatprep.subr.bf16.mxu0 0
      %507 = vmatpush1.bf16.msra.mxu0 %v490
      %508 = vmatprep.subr.bf16.mxu0 0
      %509 = vmatpush2.bf16.msra.mxu0 0
      %510 = vmatprep.subr.bf16.mxu0 0
      %511 = vmatpush2.bf16.msra.mxu0 0
      %512 = vmatprep.subr.bf16.mxu0 0
      %513 = vmatpush2.bf16.msra.mxu0 0
      %514 = vmatprep.subr.bf16.mxu0 0
      %515 = vmatpush2.bf16.msra.mxu0 0
      %516 = vmatprep.subr.bf16.mxu0 0
      %517 = vmatpush2.bf16.msra.mxu0 0
      %518 = vmatprep.subr.bf16.mxu0 0
      %519 = vmatpush2.bf16.msra.mxu0 0
      %520 = vmatprep.subr.bf16.mxu0 0
      %521 = vmatpush2.bf16.msra.mxu0 0
      %522 = vmatprep.subr.bf16.mxu0 0
      %523 = vmatpush2.bf16.msra.mxu0 0
      %524 = vmatprep.mubr.bf16.mxu0 0
      %525 = vmatmul.mubr.bf16.gmra.mxu0 %v486
      %v526 = vpop.f32.mrf.mxu0
      %v527 = vadd.f32 %v477, %v526
      %v528 = vpop.f32.mrf.mxu0
      %v529 = vpop.f32.mrf.mxu0
      %v530 = vadd.f32 %v478, %v529
      %v531 = vpop.f32.mrf.mxu0
      %532 = vdwg.mxu0
      %v533 = vld [vmem:[%s4] sm:$0xff]
      %v534 = vld [vmem:[%s4 + $0x8] sm:$0xff]
      %536 = vset.pattern.permute.xlu0 0
      %537 = vperm.xlu0 %536, %v533
      %v538 = vpop.permute.xlu0 %537
      %541 = vset.pattern.permute.xlu0 0
      %542 = vperm.xlu0 %541, %v534
      %v543 = vpop.permute.xlu0 %542
      %v545 = vadd.f32 %v527, %v538
      %v546 = vadd.f32 %v530, %v543
      %v547 = vmax.f32 %v545, 0.0
      %v548 = vmax.f32 %v546, 0.0
      %v549 = vld [vmem:[%s5] sm:$0xf]
      %v550 = vld [vmem:[%s5 + $0x4] sm:$0xf]
      %v551 = vld [vmem:[%s5 + $0x8] sm:$0xf]
      %v552 = vld [vmem:[%s5 + $0xc] sm:$0xf]
      %v553 = vpack.c.bf16 %v548, %v547
      %v554 = vld [vmem:[%s6] sm:$0xff]
      %v555 = vld [vmem:[%s6 + $0x8] sm:$0xff]
      %v556 = vld [vmem:[%s6 + $0x10] sm:$0xff]
      %v557 = vld [vmem:[%s6 + $0x18] sm:$0xff]
      %559 = vset.pattern.permute.xlu0 0
      %560 = vperm.xlu0 %559, %v554
      %v561 = vpop.permute.xlu0 %560
      %564 = vset.pattern.permute.xlu0 0
      %565 = vperm.xlu0 %564, %v555
      %v566 = vpop.permute.xlu0 %565
      %569 = vset.pattern.permute.xlu0 0
      %570 = vperm.xlu0 %569, %v556
      %v571 = vpop.permute.xlu0 %570
      %574 = vset.pattern.permute.xlu0 0
      %575 = vperm.xlu0 %574, %v557
      %v576 = vpop.permute.xlu0 %575
      %v582 = vunpack.c.l.b16 %v549
      %v583 = vunpack.c.l.b16 %v550
      %v584 = vunpack.c.l.b16 %v551
      %v585 = vunpack.c.l.b16 %v552
      %v586 = vpack.c.b16 %v583, %v582
      %v587 = vpack.c.b16 %v585, %v584
      %vm588 = vcmask 130048
      %v590 = vsel %vm588, %v586, 0
      %v593 = vsel %vm588, %v587, 0
      %595 = vmatprep.subr.bf16.mxu0 0
      %596 = vmatpush1.bf16.msra.mxu0 0
      %597 = vmatprep.subr.bf16.mxu0 0
      %598 = vmatpush1.bf16.msra.mxu0 0
      %599 = vmatprep.subr.bf16.mxu0 0
      %600 = vmatpush1.bf16.msra.mxu0 0
      %601 = vmatprep.subr.bf16.mxu0 0
      %602 = vmatpush1.bf16.msra.mxu0 0
      %603 = vmatprep.subr.bf16.mxu0 0
      %604 = vmatpush1.bf16.msra.mxu0 0
      %605 = vmatprep.subr.bf16.mxu0 0
      %606 = vmatpush1.bf16.msra.mxu0 0
      %607 = vmatprep.subr.bf16.mxu0 0
      %608 = vmatpush1.bf16.msra.mxu0 0
      %609 = vmatprep.subr.bf16.mxu0 0
      %610 = vmatpush1.bf16.msra.mxu0 %v553
      %611 = vmatprep.subr.bf16.mxu0 0
      %612 = vmatpush2.bf16.msra.mxu0 0
      %613 = vmatprep.subr.bf16.mxu0 0
      %614 = vmatpush2.bf16.msra.mxu0 0
      %615 = vmatprep.subr.bf16.mxu0 0
      %616 = vmatpush2.bf16.msra.mxu0 0
      %617 = vmatprep.subr.bf16.mxu0 0
      %618 = vmatpush2.bf16.msra.mxu0 0
      %619 = vmatprep.subr.bf16.mxu0 0
      %620 = vmatpush2.bf16.msra.mxu0 0
      %621 = vmatprep.subr.bf16.mxu0 0
      %622 = vmatpush2.bf16.msra.mxu0 0
      %623 = vmatprep.subr.bf16.mxu0 0
      %624 = vmatpush2.bf16.msra.mxu0 0
      %625 = vmatprep.subr.bf16.mxu0 0
      %626 = vmatpush2.bf16.msra.mxu0 0
      %627 = vmatprep.mubr.bf16.mxu0 0
      %628 = vmatmul.mubr.bf16.gmra.mxu0 %v590
      %v629 = vpop.f32.mrf.mxu0
      %v630 = vadd.f32 %v561, %v629
      %v631 = vpop.f32.mrf.mxu0
      %v632 = vpop.f32.mrf.mxu0
      %v633 = vadd.f32 %v566, %v632
      %v634 = vpop.f32.mrf.mxu0
      %635 = vmatprep.mubr.bf16.mxu0 0
      %636 = vmatmul.mubr.bf16.gmra.mxu0 %v593
      %v637 = vpop.f32.mrf.mxu0
      %v638 = vadd.f32 %v571, %v637
      %v639 = vpop.f32.mrf.mxu0
      %v640 = vpop.f32.mrf.mxu0
      %v641 = vadd.f32 %v576, %v640
      %v642 = vpop.f32.mrf.mxu0
      %643 = vdwg.mxu0
      %v644 = vmax.f32 %v630, 0.0
      %v645 = vmax.f32 %v633, 0.0
      %v646 = vmax.f32 %v638, 0.0
      %v647 = vmax.f32 %v641, 0.0
      %v648 = vld [vmem:[%s7] sm:$0xf]
      %v649 = vld [vmem:[%s7 + $0x4] sm:$0xf]
      %v650 = vld [vmem:[%s7 + $0x8] sm:$0xf]
      %v651 = vld [vmem:[%s7 + $0xc] sm:$0xf]
      %v652 = vld [vmem:[%s7 + $0x10] sm:$0xf]
      %v653 = vld [vmem:[%s7 + $0x14] sm:$0xf]
      %v654 = vld [vmem:[%s7 + $0x18] sm:$0xf]
      %v655 = vld [vmem:[%s7 + $0x1c] sm:$0xf]
      %v656 = vpack.c.bf16 %v645, %v644
      %v657 = vpack.c.bf16 %v647, %v646
      %v658 = vld [vmem:[%s8] sm:$0xff]
      %v659 = vld [vmem:[%s8 + $0x8] sm:$0xff]
      %v660 = vld [vmem:[%s8 + $0x10] sm:$0xff]
      %v661 = vld [vmem:[%s8 + $0x18] sm:$0xff]
      %v662 = vld [vmem:[%s8 + $0x20] sm:$0xff]
      %v663 = vld [vmem:[%s8 + $0x28] sm:$0xff]
      %v664 = vld [vmem:[%s8 + $0x30] sm:$0xff]
      %v665 = vld [vmem:[%s8 + $0x38] sm:$0xff]
      %667 = vset.pattern.permute.xlu0 0
      %668 = vperm.xlu0 %667, %v658
      %v669 = vpop.permute.xlu0 %668
      %672 = vset.pattern.permute.xlu0 0
      %673 = vperm.xlu0 %672, %v659
      %v674 = vpop.permute.xlu0 %673
      %677 = vset.pattern.permute.xlu0 0
      %678 = vperm.xlu0 %677, %v660
      %v679 = vpop.permute.xlu0 %678
      %682 = vset.pattern.permute.xlu0 0
      %683 = vperm.xlu0 %682, %v661
      %v684 = vpop.permute.xlu0 %683
      %687 = vset.pattern.permute.xlu0 0
      %688 = vperm.xlu0 %687, %v662
      %v689 = vpop.permute.xlu0 %688
      %692 = vset.pattern.permute.xlu0 0
      %693 = vperm.xlu0 %692, %v663
      %v694 = vpop.permute.xlu0 %693
      %697 = vset.pattern.permute.xlu0 0
      %698 = vperm.xlu0 %697, %v664
      %v699 = vpop.permute.xlu0 %698
      %702 = vset.pattern.permute.xlu0 0
      %703 = vperm.xlu0 %702, %v665
      %v704 = vpop.permute.xlu0 %703
      %v714 = vunpack.c.l.b16 %v648
      %v715 = vunpack.c.l.b16 %v649
      %v716 = vunpack.c.l.b16 %v650
      %v717 = vunpack.c.l.b16 %v651
      %v718 = vunpack.c.l.b16 %v652
      %v719 = vunpack.c.l.b16 %v653
      %v720 = vunpack.c.l.b16 %v654
      %v721 = vunpack.c.l.b16 %v655
      %v722 = vpack.c.b16 %v715, %v714
      %v723 = vpack.c.b16 %v717, %v716
      %v724 = vpack.c.b16 %v719, %v718
      %v725 = vpack.c.b16 %v721, %v720
      %vm726 = vcmask 261120
      %v728 = vsel %vm726, %v722, 0
      %v731 = vsel %vm726, %v723, 0
      %v734 = vsel %vm726, %v724, 0
      %v737 = vsel %vm726, %v725, 0
      %739 = vmatprep.subr.bf16.mxu0 0
      %740 = vmatpush1.bf16.msra.mxu0 0
      %741 = vmatprep.subr.bf16.mxu0 0
      %742 = vmatpush1.bf16.msra.mxu0 0
      %743 = vmatprep.subr.bf16.mxu0 0
      %744 = vmatpush1.bf16.msra.mxu0 0
      %745 = vmatprep.subr.bf16.mxu0 0
      %746 = vmatpush1.bf16.msra.mxu0 0
      %747 = vmatprep.subr.bf16.mxu0 0
      %748 = vmatpush1.bf16.msra.mxu0 0
      %749 = vmatprep.subr.bf16.mxu0 0
      %750 = vmatpush1.bf16.msra.mxu0 0
      %751 = vmatprep.subr.bf16.mxu0 0
      %752 = vmatpush1.bf16.msra.mxu0 %v657
      %753 = vmatprep.subr.bf16.mxu0 0
      %754 = vmatpush1.bf16.msra.mxu0 %v656
      %755 = vmatprep.subr.bf16.mxu0 0
      %756 = vmatpush2.bf16.msra.mxu0 0
      %757 = vmatprep.subr.bf16.mxu0 0
      %758 = vmatpush2.bf16.msra.mxu0 0
      %759 = vmatprep.subr.bf16.mxu0 0
      %760 = vmatpush2.bf16.msra.mxu0 0
      %761 = vmatprep.subr.bf16.mxu0 0
      %762 = vmatpush2.bf16.msra.mxu0 0
      %763 = vmatprep.subr.bf16.mxu0 0
      %764 = vmatpush2.bf16.msra.mxu0 0
      %765 = vmatprep.subr.bf16.mxu0 0
      %766 = vmatpush2.bf16.msra.mxu0 0
      %767 = vmatprep.subr.bf16.mxu0 0
      %768 = vmatpush2.bf16.msra.mxu0 0
      %769 = vmatprep.subr.bf16.mxu0 0
      %770 = vmatpush2.bf16.msra.mxu0 0
      %771 = vmatprep.mubr.bf16.mxu0 0
      %772 = vmatmul.mubr.bf16.gmra.mxu0 %v728
      %v773 = vpop.f32.mrf.mxu0
      %v774 = vadd.f32 %v669, %v773
      %v775 = vpop.f32.mrf.mxu0
      %v776 = vpop.f32.mrf.mxu0
      %v777 = vadd.f32 %v674, %v776
      %v778 = vpop.f32.mrf.mxu0
      %779 = vmatprep.mubr.bf16.mxu0 0
      %780 = vmatmul.mubr.bf16.gmra.mxu0 %v731
      %v781 = vpop.f32.mrf.mxu0
      %v782 = vadd.f32 %v679, %v781
      %v783 = vpop.f32.mrf.mxu0
      %v784 = vpop.f32.mrf.mxu0
      %v785 = vadd.f32 %v684, %v784
      %v786 = vpop.f32.mrf.mxu0
      %787 = vmatprep.mubr.bf16.mxu0 0
      %788 = vmatmul.mubr.bf16.gmra.mxu0 %v734
      %v789 = vpop.f32.mrf.mxu0
      %v790 = vadd.f32 %v689, %v789
      %v791 = vpop.f32.mrf.mxu0
      %v792 = vpop.f32.mrf.mxu0
      %v793 = vadd.f32 %v694, %v792
      %v794 = vpop.f32.mrf.mxu0
      %795 = vmatprep.mubr.bf16.mxu0 0
      %796 = vmatmul.mubr.bf16.gmra.mxu0 %v737
      %v797 = vpop.f32.mrf.mxu0
      %v798 = vadd.f32 %v699, %v797
      %v799 = vpop.f32.mrf.mxu0
      %v800 = vpop.f32.mrf.mxu0
      %v801 = vadd.f32 %v704, %v800
      %v802 = vpop.f32.mrf.mxu0
      %803 = vdwg.mxu0
      %v804 = vmax.f32 %v774, 0.0
      %v805 = vmax.f32 %v777, 0.0
      %v806 = vmax.f32 %v782, 0.0
      %v807 = vmax.f32 %v785, 0.0
      %v808 = vmax.f32 %v790, 0.0
      %v809 = vmax.f32 %v793, 0.0
      %v810 = vmax.f32 %v798, 0.0
      %v811 = vmax.f32 %v801, 0.0
      %v812 = vld [vmem:[#allocation2] sm:$0xff]
      %v813 = vld [vmem:[#allocation2 + $0x8] sm:$0xff]
      %v814 = vld [vmem:[#allocation2 + $0x10] sm:$0xff]
      %v815 = vld [vmem:[#allocation2 + $0x18] sm:$0xff]
      %v816 = vld [vmem:[#allocation2 + $0x20] sm:$0xff]
      %v817 = vld [vmem:[#allocation2 + $0x28] sm:$0xff]
      %v818 = vld [vmem:[#allocation2 + $0x30] sm:$0xff]
      %v819 = vld [vmem:[#allocation2 + $0x38] sm:$0xff]
      %v820 = vmax.f32 %v812, %v804
      %v821 = vmax.f32 %v813, %v805
      %v822 = vmax.f32 %v814, %v806
      %v823 = vmax.f32 %v815, %v807
      %v824 = vmax.f32 %v816, %v808
      %v825 = vmax.f32 %v817, %v809
      %v826 = vmax.f32 %v818, %v810
      %v827 = vmax.f32 %v819, %v811
      %828 = vst [vmem:[#allocation2] sm:$0xff] %v820
      %829 = vst [vmem:[#allocation2 + $0x8] sm:$0xff] %v821
      %830 = vst [vmem:[#allocation2 + $0x10] sm:$0xff] %v822
      %831 = vst [vmem:[#allocation2 + $0x18] sm:$0xff] %v823
      %832 = vst [vmem:[#allocation2 + $0x20] sm:$0xff] %v824
      %833 = vst [vmem:[#allocation2 + $0x28] sm:$0xff] %v825
      %834 = vst [vmem:[#allocation2 + $0x30] sm:$0xff] %v826
      %835 = vst [vmem:[#allocation2 + $0x38] sm:$0xff] %v827
      // Predicated region
      $region61: #{tpu_custom_call.1} parent=55 // pred_check
        %p836 = pneg %p413
      $region62: #{tpu_custom_call.1} parent=55 // pred_check_branch
        %838 = sbr.rel (%p836) target = $region64
      $region63: #{tpu_custom_call.1} parent=55 // pred_region
        %v839 = vld [vmem:[#allocation2] sm:$0xff]
        %v840 = vld [vmem:[#allocation2 + $0x8] sm:$0xff]
        %v841 = vld [vmem:[#allocation2 + $0x10] sm:$0xff]
        %v842 = vld [vmem:[#allocation2 + $0x18] sm:$0xff]
        %v843 = vld [vmem:[#allocation2 + $0x20] sm:$0xff]
        %v844 = vld [vmem:[#allocation2 + $0x28] sm:$0xff]
        %v845 = vld [vmem:[#allocation2 + $0x30] sm:$0xff]
        %v846 = vld [vmem:[#allocation2 + $0x38] sm:$0xff]
        %847 = vmax.xlane.f32.xlu0 %v839
        %v848 = vpop.xlane.xlu0 %847
        %849 = vmax.xlane.f32.xlu0 %v840
        %v850 = vpop.xlane.xlu0 %849
        %851 = vmax.xlane.f32.xlu0 %v841
        %v852 = vpop.xlane.xlu0 %851
        %853 = vmax.xlane.f32.xlu0 %v842
        %v854 = vpop.xlane.xlu0 %853
        %855 = vmax.xlane.f32.xlu0 %v843
        %v856 = vpop.xlane.xlu0 %855
        %857 = vmax.xlane.f32.xlu0 %v844
        %v858 = vpop.xlane.xlu0 %857
        %859 = vmax.xlane.f32.xlu0 %v845
        %v860 = vpop.xlane.xlu0 %859
        %861 = vmax.xlane.f32.xlu0 %v846
        %v862 = vpop.xlane.xlu0 %861
        %vm863 = vcmask 7168
        %864 = vst.msk [vmem:[%s411] sm:$0xff] %vm863, %v848
        %865 = vst.msk [vmem:[%s411 + $0x8] sm:$0xff] %vm863, %v850
        %866 = vst.msk [vmem:[%s411 + $0x10] sm:$0xff] %vm863, %v852
        %867 = vst.msk [vmem:[%s411 + $0x18] sm:$0xff] %vm863, %v854
        %868 = vst.msk [vmem:[%s411 + $0x20] sm:$0xff] %vm863, %v856
        %869 = vst.msk [vmem:[%s411 + $0x28] sm:$0xff] %vm863, %v858
        %870 = vst.msk [vmem:[%s411 + $0x30] sm:$0xff] %vm863, %v860
        %871 = vst.msk [vmem:[%s411 + $0x38] sm:$0xff] %vm863, %v862
      $region64: #{tpu_custom_call.1} parent=55 // pred_fallthru
        _
      %p872 = scmp.lt.s32.totalorder %s25, 1
      %s873 = scalar_select %p872, %s25, 1
      %p874 = scmp.lt.s32.totalorder %s26, 0
      %s875 = scalar_select %p874, %s26, 0
      %s876 = smul.addr %s875, 8
      %s877 = smul.addr %s873, 8
      %s878 = sadd.s32 %s876, %s877
      %s879 = smul.addr %s878, 8
      %s880 = scalar_lea.vmem %s9, %s879
      // Predicated region
      $region65: #{tpu_custom_call.1} parent=55 // pred_check
        %p881 = pneg %p266
      $region66: #{tpu_custom_call.1} parent=55 // pred_check_branch
        %883 = sbr.rel (%p881) target = $region68
      $region67: #{tpu_custom_call.1} parent=55 // pred_region
        _
      $region68: #{tpu_custom_call.1} parent=55 // pred_fallthru
        _
    $region56: #{tpu_custom_call.1} parent=5 // pred_fallthru
      _
    %p884 = scmp.le.s32.totalorder 2, %s15
    // Predicated region
    $region69: #{tpu_custom_call.1} parent=5 // pred_check
      %p885 = pneg %p884
    $region70: #{tpu_custom_call.1} parent=5 // pred_check_branch
      %887 = sbr.rel (%p885) target = $region72
    $region71: #{tpu_custom_call.1} parent=5 // pred_region
      %s888 = ssub.s32 %s15, 2
      // Predicated region
      $region73: #{tpu_custom_call.1} parent=71 // pred_check
        %p889 = pneg %p272
      $region74: #{tpu_custom_call.1} parent=71 // pred_check_branch
        %891 = sbr.rel (%p889) target = $region76
      $region75: #{tpu_custom_call.1} parent=71 // pred_region
        %p892 = scmp.lt.s32.totalorder %s28, 1
        %s893 = scalar_select %p892, %s28, 1
        %p894 = scmp.lt.s32.totalorder %s29, 0
        %s895 = scalar_select %p894, %s29, 0
        %s896 = smul.addr %s895, 8
        %s897 = smul.addr %s893, 8
        %s898 = sadd.s32 %s896, %s897
        %s899 = smul.addr %s898, 8
        %s900 = scalar_lea.vmem %s9, %s899
      $region76: #{tpu_custom_call.1} parent=71 // pred_fallthru
        _
    $region72: #{tpu_custom_call.1} parent=5 // pred_fallthru
      _
  $region6: #{tpu_custom_call.1} parent=0 // loop_footer
    %s19 = sadd.s32 1, %s15
  $region7: #{tpu_custom_call.1} parent=0 // loop_footer_branch
    %14 = sbr.rel target = $region3
  $region8: #{tpu_custom_call.1} parent=0 // loop_exit
    _

</llo_original>
